<compile_context>
chip_gen: v6e
topology: v6e:2x2x1
jax: 0.10.0
libtpu: 0.0.40
codegen_flags: <defaults>
</compile_context>

<pallas_src>
import jax
import jax.numpy as jnp
from jax.experimental import pallas as pl
from jax.experimental.pallas import tpu as pltpu

MAX_TILE_B = 2048   # batch rows per grid step (multiple of 8); ~1 MiB footprint


def _round_up(x, m):
    return (x + m - 1) // m * m


def nin2d_kernel(x_ref, w1_ref, b1_ref, w2_ref, b2_ref, w3_ref, b3_ref, o_ref):
    # One batch tile: three MXU matmuls fused with VPU bias-add / ReLU.
    x = x_ref[...]
    h1 = jnp.dot(x, w1_ref[...], preferred_element_type=jnp.float32) + b1_ref[...]
    h1 = jnp.maximum(h1, 0.0)
    h2 = jnp.dot(h1, w2_ref[...], preferred_element_type=jnp.float32) + b2_ref[...]
    h2 = jnp.maximum(h2, 0.0)
    out = jnp.dot(h2, w3_ref[...], preferred_element_type=jnp.float32) + b3_ref[...]
    o_ref[...] = out.astype(o_ref.dtype)


def _batch_dim_semantics(num_steps):
    """v7x (2 TCs/chip): CORE_PARALLEL actually shards the batch-grid axis
    across cores.  Elsewhere (1 TC/chip) plain "parallel" is always safe."""
    try:
        kind = jax.devices()[0].device_kind.lower()
    except Exception:  # pragma: no cover - defensive
        kind = ""
    is_v7x = ("v7" in kind) or ("7x" in kind)
    if is_v7x and num_steps >= 2 and hasattr(pltpu, "CORE_PARALLEL"):
        return (pltpu.CORE_PARALLEL,)
    return ("parallel",)


def nin2d_forward(x, params):
    """x: (B, hidden_dim + ex_dim) float32 -> (B, out_dim) float32."""
    w1, b1, w2, b2, w3, b3 = params
    B, in_dim = x.shape
    hid_dim = w1.shape[1]
    out_dim = w3.shape[1]

    # Batch tile: multiple of 8 sublanes, large (fewer per-step overheads),
    # but capped so the grid has >= 2 steps whenever the batch allows
    # (keeps both v7x TensorCores busy under CORE_PARALLEL).
    tile_b = min(MAX_TILE_B,
                 _round_up(pl.cdiv(B, 2), 8),
                 _round_up(B, 8))
    grid = (pl.cdiv(B, tile_b),)

    # x / out blocked over batch only; channel dims are the full array dims
    # (no padding, no masking cost on the K side).  Weights & biases use a
    # constant index_map so they stay resident in VMEM across all grid steps.
    x_spec = pl.BlockSpec((tile_b, in_dim), lambda i: (i, 0))
    w1_spec = pl.BlockSpec((in_dim, hid_dim), lambda i: (0, 0))
    b1_spec = pl.BlockSpec((1, hid_dim), lambda i: (0, 0))
    w2_spec = pl.BlockSpec((hid_dim, hid_dim), lambda i: (0, 0))
    b2_spec = pl.BlockSpec((1, hid_dim), lambda i: (0, 0))
    w3_spec = pl.BlockSpec((hid_dim, out_dim), lambda i: (0, 0))
    b3_spec = pl.BlockSpec((1, out_dim), lambda i: (0, 0))
    o_spec = pl.BlockSpec((tile_b, out_dim), lambda i: (i, 0))

    return pl.pallas_call(
        nin2d_kernel,
        out_shape=jax.ShapeDtypeStruct((B, out_dim), jnp.float32),
        grid_spec=pltpu.PrefetchScalarGridSpec(
            num_scalar_prefetch=0,
            grid=grid,
            in_specs=[x_spec, w1_spec, b1_spec, w2_spec, b2_spec, w3_spec, b3_spec],
            out_specs=o_spec,
        ),
        compiler_params=pltpu.CompilerParams(
            dimension_semantics=_batch_dim_semantics(grid[0]),
            vmem_limit_bytes=32 << 20,   # v5e default scoped limit is only 16 MiB
        ),
    )(x, w1, b1, w2, b2, w3, b3)


def init_params(key, in_dim, hidden_dim, out_dim):
    """Deterministic init mimicking nn.Conv2d default (uniform +/- 1/sqrt(fan_in))."""
    ks = jax.random.split(key, 6)

    def uni(k, shape, fan_in):
        bound = 1.0 / jnp.sqrt(fan_in)
        return jax.random.uniform(k, shape, jnp.float32, -bound, bound)

    w1 = uni(ks[0], (in_dim, hidden_dim), in_dim)       # conv1 weight^T
    b1 = uni(ks[1], (1, hidden_dim), in_dim)            # conv1 bias
    w2 = uni(ks[2], (hidden_dim, hidden_dim), hidden_dim)
    b2 = uni(ks[3], (1, hidden_dim), hidden_dim)
    w3 = uni(ks[4], (hidden_dim, out_dim), hidden_dim)
    b3 = uni(ks[5], (1, out_dim), hidden_dim)
    return (w1, b1, w2, b2, w3, b3)


def nin2d_reference(x, params):
    """Pure-JAX reference of the PyTorch forward (for verification)."""
    w1, b1, w2, b2, w3, b3 = params
    h = jnp.maximum(x @ w1 + b1, 0.0)
    h = jnp.maximum(h @ w2 + b2, 0.0)
    return h @ w3 + b3


if __name__ == "__main__":
    # args.hidden_dim=32, args.ex_dim=16, args.out_dim=24; batch=8
    hidden_dim, ex_dim, out_dim = 32, 16, 24
    batch = 8
    in_dim = hidden_dim + ex_dim

    key = jax.random.PRNGKey(0)
    kx, kp = jax.random.split(key)
    x = jax.random.normal(kx, (batch, in_dim), dtype=jnp.float32)
    params = init_params(kp, in_dim, hidden_dim, out_dim)

    out = nin2d_forward(x, params)
    out = jax.block_until_ready(out)

    ref = nin2d_reference(x, params)
    assert out.shape == (batch, out_dim)
    assert jnp.allclose(out, ref, atol=1e-5, rtol=1e-5)

    # Larger, non-multiple batch: exercises the 2-step grid and the clipped
    # partial last block (no batch padding, no output slice).
    x_big = jax.random.normal(kx, (1000, in_dim), dtype=jnp.float32)
    out_big = jax.block_until_ready(nin2d_forward(x_big, params))
    ref_big = nin2d_reference(x_big, params)
    assert out_big.shape == (1000, out_dim)
    assert jnp.allclose(out_big, ref_big, atol=1e-5, rtol=1e-5)

    print("KERNEL_OK")
</pallas_src>

<mosaic_0001>
module attributes {stable_mosaic.version = 11 : i64} {
  func.func @nin2d_kernel(%arg0: i32, %arg1: memref<8x48xf32, #tpu.memory_space<vmem>>, %arg2: memref<48x32xf32, #tpu.memory_space<vmem>>, %arg3: memref<1x32xf32, #tpu.memory_space<vmem>>, %arg4: memref<32x32xf32, #tpu.memory_space<vmem>>, %arg5: memref<1x32xf32, #tpu.memory_space<vmem>>, %arg6: memref<32x24xf32, #tpu.memory_space<vmem>>, %arg7: memref<1x24xf32, #tpu.memory_space<vmem>>, %arg8: memref<8x24xf32, #tpu.memory_space<vmem>>) attributes {dimension_semantics = [#tpu.dimension_semantics<parallel>], iteration_bounds = array<i64: 1>, scalar_prefetch = 0 : i64, scratch_operands = 0 : i64, tpu.core_type = #tpu.core_type<tc>, window_params = [{transform_indices = @transform_0, window_bounds = array<i64: 8, 48>}, {pipeline_mode = #tpu.pipeline_mode<synchronous>, transform_indices = @transform_1, window_bounds = array<i64: 48, 32>}, {pipeline_mode = #tpu.pipeline_mode<synchronous>, transform_indices = @transform_2, window_bounds = array<i64: 1, 32>}, {pipeline_mode = #tpu.pipeline_mode<synchronous>, transform_indices = @transform_3, window_bounds = array<i64: 32, 32>}, {pipeline_mode = #tpu.pipeline_mode<synchronous>, transform_indices = @transform_4, window_bounds = array<i64: 1, 32>}, {pipeline_mode = #tpu.pipeline_mode<synchronous>, transform_indices = @transform_5, window_bounds = array<i64: 32, 24>}, {pipeline_mode = #tpu.pipeline_mode<synchronous>, transform_indices = @transform_6, window_bounds = array<i64: 1, 24>}, {transform_indices = @transform_7, window_bounds = array<i64: 8, 24>}]} {
    %c0 = arith.constant 0 : index
    %c0_0 = arith.constant 0 : index
    %0 = vector.load %arg1[%c0, %c0_0] : memref<8x48xf32, #tpu.memory_space<vmem>>, vector<8x48xf32>
    %c0_1 = arith.constant 0 : index
    %c0_2 = arith.constant 0 : index
    %1 = vector.load %arg2[%c0_1, %c0_2] : memref<48x32xf32, #tpu.memory_space<vmem>>, vector<48x32xf32>
    %cst = arith.constant dense<0.000000e+00> : vector<8x32xf32>
    %2 = tpu.matmul %0, %1, %cst {dimension_numbers = #tpu.dot_dimension_numbers<[1], [0], [0], [1], [0, 0, 1, 1], [], []>} : vector<8x48xf32>, vector<48x32xf32>, vector<8x32xf32> -> vector<8x32xf32>
    %c0_3 = arith.constant 0 : index
    %c0_4 = arith.constant 0 : index
    %3 = vector.load %arg3[%c0_3, %c0_4] : memref<1x32xf32, #tpu.memory_space<vmem>>, vector<1x32xf32>
    %4 = vector.broadcast %3 : vector<1x32xf32> to vector<8x32xf32>
    %5 = arith.addf %2, %4 : vector<8x32xf32>
    %cst_5 = arith.constant 0.000000e+00 : f32
    %6 = vector.broadcast %cst_5 : f32 to vector<8x32xf32>
    %7 = arith.maximumf %5, %6 : vector<8x32xf32>
    %c0_6 = arith.constant 0 : index
    %c0_7 = arith.constant 0 : index
    %8 = vector.load %arg4[%c0_6, %c0_7] : memref<32x32xf32, #tpu.memory_space<vmem>>, vector<32x32xf32>
    %cst_8 = arith.constant dense<0.000000e+00> : vector<8x32xf32>
    %9 = tpu.matmul %7, %8, %cst_8 {dimension_numbers = #tpu.dot_dimension_numbers<[1], [0], [0], [1], [0, 0, 1, 1], [], []>} : vector<8x32xf32>, vector<32x32xf32>, vector<8x32xf32> -> vector<8x32xf32>
    %c0_9 = arith.constant 0 : index
    %c0_10 = arith.constant 0 : index
    %10 = vector.load %arg5[%c0_9, %c0_10] : memref<1x32xf32, #tpu.memory_space<vmem>>, vector<1x32xf32>
    %11 = vector.broadcast %10 : vector<1x32xf32> to vector<8x32xf32>
    %12 = arith.addf %9, %11 : vector<8x32xf32>
    %cst_11 = arith.constant 0.000000e+00 : f32
    %13 = vector.broadcast %cst_11 : f32 to vector<8x32xf32>
    %14 = arith.maximumf %12, %13 : vector<8x32xf32>
    %c0_12 = arith.constant 0 : index
    %c0_13 = arith.constant 0 : index
    %15 = vector.load %arg6[%c0_12, %c0_13] : memref<32x24xf32, #tpu.memory_space<vmem>>, vector<32x24xf32>
    %cst_14 = arith.constant dense<0.000000e+00> : vector<8x24xf32>
    %16 = tpu.matmul %14, %15, %cst_14 {dimension_numbers = #tpu.dot_dimension_numbers<[1], [0], [0], [1], [0, 0, 1, 1], [], []>} : vector<8x32xf32>, vector<32x24xf32>, vector<8x24xf32> -> vector<8x24xf32>
    %c0_15 = arith.constant 0 : index
    %c0_16 = arith.constant 0 : index
    %17 = vector.load %arg7[%c0_15, %c0_16] : memref<1x24xf32, #tpu.memory_space<vmem>>, vector<1x24xf32>
    %18 = vector.broadcast %17 : vector<1x24xf32> to vector<8x24xf32>
    %19 = arith.addf %16, %18 : vector<8x24xf32>
    %c0_17 = arith.constant 0 : index
    %c0_18 = arith.constant 0 : index
    %20 = vector.load %arg8[%c0_17, %c0_18] : memref<8x24xf32, #tpu.memory_space<vmem>>, vector<8x24xf32>
    tpu.vector_store %arg8[%c0_17, %c0_18], %19 {strides = array<i32>} : memref<8x24xf32, #tpu.memory_space<vmem>>, vector<8x24xf32>,
    return
  }
  func.func @transform_0(%arg0: i32) -> (i32, i32) {
    %c0_i32 = arith.constant 0 : i32
    %c0_i32_0 = arith.constant 0 : i32
    return %arg0, %c0_i32 : i32, i32
  }
  func.func @transform_1(%arg0: i32) -> (i32, i32) {
    %c0_i32 = arith.constant 0 : i32
    %c0_i32_0 = arith.constant 0 : i32
    %c0_i32_1 = arith.constant 0 : i32
    return %c0_i32, %c0_i32_0 : i32, i32
  }
  func.func @transform_2(%arg0: i32) -> (i32, i32) {
    %c0_i32 = arith.constant 0 : i32
    %c0_i32_0 = arith.constant 0 : i32
    %c0_i32_1 = arith.constant 0 : i32
    return %c0_i32, %c0_i32_0 : i32, i32
  }
  func.func @transform_3(%arg0: i32) -> (i32, i32) {
    %c0_i32 = arith.constant 0 : i32
    %c0_i32_0 = arith.constant 0 : i32
    %c0_i32_1 = arith.constant 0 : i32
    return %c0_i32, %c0_i32_0 : i32, i32
  }
  func.func @transform_4(%arg0: i32) -> (i32, i32) {
    %c0_i32 = arith.constant 0 : i32
    %c0_i32_0 = arith.constant 0 : i32
    %c0_i32_1 = arith.constant 0 : i32
    return %c0_i32, %c0_i32_0 : i32, i32
  }
  func.func @transform_5(%arg0: i32) -> (i32, i32) {
    %c0_i32 = arith.constant 0 : i32
    %c0_i32_0 = arith.constant 0 : i32
    %c0_i32_1 = arith.constant 0 : i32
    return %c0_i32, %c0_i32_0 : i32, i32
  }
  func.func @transform_6(%arg0: i32) -> (i32, i32) {
    %c0_i32 = arith.constant 0 : i32
    %c0_i32_0 = arith.constant 0 : i32
    %c0_i32_1 = arith.constant 0 : i32
    return %c0_i32, %c0_i32_0 : i32, i32
  }
  func.func @transform_7(%arg0: i32) -> (i32, i32) {
    %c0_i32 = arith.constant 0 : i32
    %c0_i32_0 = arith.constant 0 : i32
    return %arg0, %c0_i32 : i32, i32
  }
}

</mosaic_0001>

<llo_original>
// kernel: tpu_custom_call.1
$region0: #{tpu_custom_call.1}
  #allocation0 [shape = 'u32[]', space=smem, size = 0x4, offset = 0x4, fixed_abs, tag = 'smem constant byte address 0x4 - core index']
  #allocation1 [shape = 'u32[144,128]{1,0:T(1,128)}', space=vmem, size = 0x12000, scoped, tag = 'internal scratch']
  %s0 = inlined_call_operand.vmem [shape: f32[8,48], index: 0, kind: input, shape index: {}]
  %s1 = inlined_call_operand.vmem [shape: f32[48,32], index: 1, kind: input, shape index: {}]
  %s2 = inlined_call_operand.vmem [shape: f32[1,32], index: 2, kind: input, shape index: {}]
  %s3 = inlined_call_operand.vmem [shape: f32[32,32], index: 3, kind: input, shape index: {}]
  %s4 = inlined_call_operand.vmem [shape: f32[1,32], index: 4, kind: input, shape index: {}]
  %s5 = inlined_call_operand.vmem [shape: f32[32,24], index: 5, kind: input, shape index: {}]
  %s6 = inlined_call_operand.vmem [shape: f32[1,24], index: 6, kind: input, shape index: {}]
  %s7 = inlined_call_operand.hbm [shape: f32[8,24], index: 7, kind: output, shape index: {}]
  %s8 = sld [smem:[#allocation0]]
  $region38: #{tpu_custom_call.1} parent=0
    _
  %s10 = ssub.s32 1, %s8
  %s11 = scalar_select 0, %s10, %s8
  $region1: #{tpu_custom_call.1} parent=0
    #allocation2 [shape = 'u8[4096]{0}', space=vmem, size = 0x1000, scoped, tag = 'output window, operand 0, single buffered']
    #allocation3 [shape = 's32[1]{0}', space=sflag, size = 0x4, scoped, tag = 'scoped memory for tpu_custom_call.1']
    %12 = vsyncpa [#allocation3], 0
    // Predicated region
    $region2: #{tpu_custom_call.1} parent=1 // pred_check
      _
    $region3: #{tpu_custom_call.1} parent=1 // pred_check_branch
      %14 = sbr.rel (0) target = $region5
    $region4: #{tpu_custom_call.1} parent=1 // pred_region
      _
    $region5: #{tpu_custom_call.1} parent=1 // pred_fallthru
      _
    // Predicated region
    $region6: #{tpu_custom_call.1} parent=1 // pred_check
      _
    $region7: #{tpu_custom_call.1} parent=1 // pred_check_branch
      %16 = sbr.rel (0) target = $region9
    $region8: #{tpu_custom_call.1} parent=1 // pred_region
      _
    $region9: #{tpu_custom_call.1} parent=1 // pred_fallthru
      _
    // Predicated region
    $region10: #{tpu_custom_call.1} parent=1 // pred_check
      _
    $region11: #{tpu_custom_call.1} parent=1 // pred_check_branch
      %18 = sbr.rel (0) target = $region13
    $region12: #{tpu_custom_call.1} parent=1 // pred_region
      _
    $region13: #{tpu_custom_call.1} parent=1 // pred_fallthru
      _
    // Predicated region
    $region14: #{tpu_custom_call.1} parent=1 // pred_check
      _
    $region15: #{tpu_custom_call.1} parent=1 // pred_check_branch
      %20 = sbr.rel (0) target = $region17
    $region16: #{tpu_custom_call.1} parent=1 // pred_region
      _
    $region17: #{tpu_custom_call.1} parent=1 // pred_fallthru
      _
    // Predicated region
    $region18: #{tpu_custom_call.1} parent=1 // pred_check
      _
    $region19: #{tpu_custom_call.1} parent=1 // pred_check_branch
      %22 = sbr.rel (0) target = $region21
    $region20: #{tpu_custom_call.1} parent=1 // pred_region
      _
    $region21: #{tpu_custom_call.1} parent=1 // pred_fallthru
      _
    // Predicated region
    $region22: #{tpu_custom_call.1} parent=1 // pred_check
      _
    $region23: #{tpu_custom_call.1} parent=1 // pred_check_branch
      %24 = sbr.rel (0) target = $region25
    $region24: #{tpu_custom_call.1} parent=1 // pred_region
      _
    $region25: #{tpu_custom_call.1} parent=1 // pred_fallthru
      _
    // Predicated region
    $region26: #{tpu_custom_call.1} parent=1 // pred_check
      _
    $region27: #{tpu_custom_call.1} parent=1 // pred_check_branch
      %26 = sbr.rel (0) target = $region29
    $region28: #{tpu_custom_call.1} parent=1 // pred_region
      _
    $region29: #{tpu_custom_call.1} parent=1 // pred_fallthru
      _
    %v27 = vld [vmem:[%s0] sm:$0xff]
    %v28 = vld [vmem:[%s1] sm:$0xff]
    %v29 = vld [vmem:[%s1 + $0x8] sm:$0xff]
    %v30 = vld [vmem:[%s1 + $0x10] sm:$0xff]
    %v31 = vld [vmem:[%s1 + $0x18] sm:$0xff]
    %v32 = vld [vmem:[%s1 + $0x20] sm:$0xff]
    %v33 = vld [vmem:[%s1 + $0x28] sm:$0xff]
    %v34 = vld [vmem:[%s2] sm:$0x1]
    %v36 = vlaneseq
    %v37 = vshrl.u32 %v36, 7
    %v38 = vsub.s32 0, %v37
    %v39 = vrot.slane %v34, %v38
    %vm41 = vcmask 392192
    %v43 = vsel %vm41, %v27, 0
    %45 = vmatprep.subr.mxu0 0.0
    %46 = vmatpush1.msra.mxu0 0.0
    %47 = vmatprep.subr.mxu0 0.0
    %48 = vmatpush1.msra.mxu0 0.0
    %49 = vmatprep.subr.mxu0 0.0
    %50 = vmatpush1.msra.mxu0 0.0
    %51 = vmatprep.subr.mxu0 0.0
    %52 = vmatpush1.msra.mxu0 0.0
    %53 = vmatprep.subr.mxu0 0.0
    %54 = vmatpush1.msra.mxu0 0.0
    %55 = vmatprep.subr.mxu0 0.0
    %56 = vmatpush1.msra.mxu0 0.0
    %57 = vmatprep.subr.mxu0 0.0
    %58 = vmatpush1.msra.mxu0 0.0
    %59 = vmatprep.subr.mxu0 0.0
    %60 = vmatpush1.msra.mxu0 0.0
    %61 = vmatprep.subr.mxu0 0.0
    %62 = vmatpush1.msra.mxu0 0.0
    %63 = vmatprep.subr.mxu0 0.0
    %64 = vmatpush1.msra.mxu0 0.0
    %65 = vmatprep.subr.mxu0 0.0
    %66 = vmatpush1.msra.mxu0 %v33
    %67 = vmatprep.subr.mxu0 0.0
    %68 = vmatpush1.msra.mxu0 %v32
    %69 = vmatprep.subr.mxu0 0.0
    %70 = vmatpush1.msra.mxu0 %v31
    %71 = vmatprep.subr.mxu0 0.0
    %72 = vmatpush1.msra.mxu0 %v30
    %73 = vmatprep.subr.mxu0 0.0
    %74 = vmatpush1.msra.mxu0 %v29
    %75 = vmatprep.subr.mxu0 0.0
    %76 = vmatpush1.msra.mxu0 %v28
    %77 = vmatprep.subr.mxu0 0.0
    %78 = vmatpush2.msra.mxu0 0.0
    %79 = vmatprep.subr.mxu0 0.0
    %80 = vmatpush2.msra.mxu0 0.0
    %81 = vmatprep.subr.mxu0 0.0
    %82 = vmatpush2.msra.mxu0 0.0
    %83 = vmatprep.subr.mxu0 0.0
    %84 = vmatpush2.msra.mxu0 0.0
    %85 = vmatprep.subr.mxu0 0.0
    %86 = vmatpush2.msra.mxu0 0.0
    %87 = vmatprep.subr.mxu0 0.0
    %88 = vmatpush2.msra.mxu0 0.0
    %89 = vmatprep.subr.mxu0 0.0
    %90 = vmatpush2.msra.mxu0 0.0
    %91 = vmatprep.subr.mxu0 0.0
    %92 = vmatpush2.msra.mxu0 0.0
    %93 = vmatprep.subr.mxu0 0.0
    %94 = vmatpush2.msra.mxu0 0.0
    %95 = vmatprep.subr.mxu0 0.0
    %96 = vmatpush2.msra.mxu0 0.0
    %97 = vmatprep.subr.mxu0 0.0
    %98 = vmatpush2.msra.mxu0 0.0
    %99 = vmatprep.subr.mxu0 0.0
    %100 = vmatpush2.msra.mxu0 0.0
    %101 = vmatprep.subr.mxu0 0.0
    %102 = vmatpush2.msra.mxu0 0.0
    %103 = vmatprep.subr.mxu0 0.0
    %104 = vmatpush2.msra.mxu0 0.0
    %105 = vmatprep.subr.mxu0 0.0
    %106 = vmatpush2.msra.mxu0 0.0
    %107 = vmatprep.subr.mxu0 0.0
    %108 = vmatpush2.msra.mxu0 0.0
    %109 = vmatprep.mubr.f32.mxu0 0.0
    %110 = vmatmul.mubr.f32.gmra.mxu0 %v43
    %v111 = vpop.f32.mrf.mxu0
    %v112 = vadd.f32 %v39, %v111
    %v113 = vpop.f32.mrf.mxu0
    %114 = vdwg.mxu0
    %v115 = vmax.f32 %v112, 0.0
    %v116 = vld [vmem:[%s3] sm:$0xff]
    %v117 = vld [vmem:[%s3 + $0x8] sm:$0xff]
    %v118 = vld [vmem:[%s3 + $0x10] sm:$0xff]
    %v119 = vld [vmem:[%s3 + $0x18] sm:$0xff]
    %v120 = vld [vmem:[%s4] sm:$0x1]
    %v122 = vlaneseq
    %v123 = vshrl.u32 %v122, 7
    %v124 = vsub.s32 0, %v123
    %v125 = vrot.slane %v120, %v124
    %vm127 = vcmask 261120
    %v129 = vsel %vm127, %v115, 0
    %131 = vmatprep.subr.mxu0 0.0
    %132 = vmatpush1.msra.mxu0 0.0
    %133 = vmatprep.subr.mxu0 0.0
    %134 = vmatpush1.msra.mxu0 0.0
    %135 = vmatprep.subr.mxu0 0.0
    %136 = vmatpush1.msra.mxu0 0.0
    %137 = vmatprep.subr.mxu0 0.0
    %138 = vmatpush1.msra.mxu0 0.0
    %139 = vmatprep.subr.mxu0 0.0
    %140 = vmatpush1.msra.mxu0 0.0
    %141 = vmatprep.subr.mxu0 0.0
    %142 = vmatpush1.msra.mxu0 0.0
    %143 = vmatprep.subr.mxu0 0.0
    %144 = vmatpush1.msra.mxu0 0.0
    %145 = vmatprep.subr.mxu0 0.0
    %146 = vmatpush1.msra.mxu0 0.0
    %147 = vmatprep.subr.mxu0 0.0
    %148 = vmatpush1.msra.mxu0 0.0
    %149 = vmatprep.subr.mxu0 0.0
    %150 = vmatpush1.msra.mxu0 0.0
    %151 = vmatprep.subr.mxu0 0.0
    %152 = vmatpush1.msra.mxu0 0.0
    %153 = vmatprep.subr.mxu0 0.0
    %154 = vmatpush1.msra.mxu0 0.0
    %155 = vmatprep.subr.mxu0 0.0
    %156 = vmatpush1.msra.mxu0 %v119
    %157 = vmatprep.subr.mxu0 0.0
    %158 = vmatpush1.msra.mxu0 %v118
    %159 = vmatprep.subr.mxu0 0.0
    %160 = vmatpush1.msra.mxu0 %v117
    %161 = vmatprep.subr.mxu0 0.0
    %162 = vmatpush1.msra.mxu0 %v116
    %163 = vmatprep.subr.mxu0 0.0
    %164 = vmatpush2.msra.mxu0 0.0
    %165 = vmatprep.subr.mxu0 0.0
    %166 = vmatpush2.msra.mxu0 0.0
    %167 = vmatprep.subr.mxu0 0.0
    %168 = vmatpush2.msra.mxu0 0.0
    %169 = vmatprep.subr.mxu0 0.0
    %170 = vmatpush2.msra.mxu0 0.0
    %171 = vmatprep.subr.mxu0 0.0
    %172 = vmatpush2.msra.mxu0 0.0
    %173 = vmatprep.subr.mxu0 0.0
    %174 = vmatpush2.msra.mxu0 0.0
    %175 = vmatprep.subr.mxu0 0.0
    %176 = vmatpush2.msra.mxu0 0.0
    %177 = vmatprep.subr.mxu0 0.0
    %178 = vmatpush2.msra.mxu0 0.0
    %179 = vmatprep.subr.mxu0 0.0
    %180 = vmatpush2.msra.mxu0 0.0
    %181 = vmatprep.subr.mxu0 0.0
    %182 = vmatpush2.msra.mxu0 0.0
    %183 = vmatprep.subr.mxu0 0.0
    %184 = vmatpush2.msra.mxu0 0.0
    %185 = vmatprep.subr.mxu0 0.0
    %186 = vmatpush2.msra.mxu0 0.0
    %187 = vmatprep.subr.mxu0 0.0
    %188 = vmatpush2.msra.mxu0 0.0
    %189 = vmatprep.subr.mxu0 0.0
    %190 = vmatpush2.msra.mxu0 0.0
    %191 = vmatprep.subr.mxu0 0.0
    %192 = vmatpush2.msra.mxu0 0.0
    %193 = vmatprep.subr.mxu0 0.0
    %194 = vmatpush2.msra.mxu0 0.0
    %195 = vmatprep.mubr.f32.mxu0 0.0
    %196 = vmatmul.mubr.f32.gmra.mxu0 %v129
    %v197 = vpop.f32.mrf.mxu0
    %v198 = vadd.f32 %v125, %v197
    %v199 = vpop.f32.mrf.mxu0
    %200 = vdwg.mxu0
    %v201 = vmax.f32 %v198, 0.0
    %v202 = vld [vmem:[%s5] sm:$0xff]
    %v203 = vld [vmem:[%s5 + $0x8] sm:$0xff]
    %v204 = vld [vmem:[%s5 + $0x10] sm:$0xff]
    %v205 = vld [vmem:[%s5 + $0x18] sm:$0xff]
    %v206 = vld [vmem:[%s6] sm:$0x1]
    %v208 = vlaneseq
    %v209 = vshrl.u32 %v208, 7
    %v210 = vsub.s32 0, %v209
    %v211 = vrot.slane %v206, %v210
    %v214 = vsel %vm127, %v201, 0
    %216 = vmatprep.subr.mxu0 0.0
    %217 = vmatpush1.msra.mxu0 0.0
    %218 = vmatprep.subr.mxu0 0.0
    %219 = vmatpush1.msra.mxu0 0.0
    %220 = vmatprep.subr.mxu0 0.0
    %221 = vmatpush1.msra.mxu0 0.0
    %222 = vmatprep.subr.mxu0 0.0
    %223 = vmatpush1.msra.mxu0 0.0
    %224 = vmatprep.subr.mxu0 0.0
    %225 = vmatpush1.msra.mxu0 0.0
    %226 = vmatprep.subr.mxu0 0.0
    %227 = vmatpush1.msra.mxu0 0.0
    %228 = vmatprep.subr.mxu0 0.0
    %229 = vmatpush1.msra.mxu0 0.0
    %230 = vmatprep.subr.mxu0 0.0
    %231 = vmatpush1.msra.mxu0 0.0
    %232 = vmatprep.subr.mxu0 0.0
    %233 = vmatpush1.msra.mxu0 0.0
    %234 = vmatprep.subr.mxu0 0.0
    %235 = vmatpush1.msra.mxu0 0.0
    %236 = vmatprep.subr.mxu0 0.0
    %237 = vmatpush1.msra.mxu0 0.0
    %238 = vmatprep.subr.mxu0 0.0
    %239 = vmatpush1.msra.mxu0 0.0
    %240 = vmatprep.subr.mxu0 0.0
    %241 = vmatpush1.msra.mxu0 %v205
    %242 = vmatprep.subr.mxu0 0.0
    %243 = vmatpush1.msra.mxu0 %v204
    %244 = vmatprep.subr.mxu0 0.0
    %245 = vmatpush1.msra.mxu0 %v203
    %246 = vmatprep.subr.mxu0 0.0
    %247 = vmatpush1.msra.mxu0 %v202
    %248 = vmatprep.subr.mxu0 0.0
    %249 = vmatpush2.msra.mxu0 0.0
    %250 = vmatprep.subr.mxu0 0.0
    %251 = vmatpush2.msra.mxu0 0.0
    %252 = vmatprep.subr.mxu0 0.0
    %253 = vmatpush2.msra.mxu0 0.0
    %254 = vmatprep.subr.mxu0 0.0
    %255 = vmatpush2.msra.mxu0 0.0
    %256 = vmatprep.subr.mxu0 0.0
    %257 = vmatpush2.msra.mxu0 0.0
    %258 = vmatprep.subr.mxu0 0.0
    %259 = vmatpush2.msra.mxu0 0.0
    %260 = vmatprep.subr.mxu0 0.0
    %261 = vmatpush2.msra.mxu0 0.0
    %262 = vmatprep.subr.mxu0 0.0
    %263 = vmatpush2.msra.mxu0 0.0
    %264 = vmatprep.subr.mxu0 0.0
    %265 = vmatpush2.msra.mxu0 0.0
    %266 = vmatprep.subr.mxu0 0.0
    %267 = vmatpush2.msra.mxu0 0.0
    %268 = vmatprep.subr.mxu0 0.0
    %269 = vmatpush2.msra.mxu0 0.0
    %270 = vmatprep.subr.mxu0 0.0
    %271 = vmatpush2.msra.mxu0 0.0
    %272 = vmatprep.subr.mxu0 0.0
    %273 = vmatpush2.msra.mxu0 0.0
    %274 = vmatprep.subr.mxu0 0.0
    %275 = vmatpush2.msra.mxu0 0.0
    %276 = vmatprep.subr.mxu0 0.0
    %277 = vmatpush2.msra.mxu0 0.0
    %278 = vmatprep.subr.mxu0 0.0
    %279 = vmatpush2.msra.mxu0 0.0
    %280 = vmatprep.mubr.f32.mxu0 0.0
    %281 = vmatmul.mubr.f32.gmra.mxu0 %v214
    %v282 = vpop.f32.mrf.mxu0
    %v283 = vadd.f32 %v211, %v282
    %v284 = vpop.f32.mrf.mxu0
    %285 = vdwg.mxu0
    %vm286 = vcmask 195584
    %287 = vst.msk [vmem:[#allocation2] sm:$0xff] %vm286, %v283
    // Predicated region
    $region30: #{tpu_custom_call.1} parent=1 // pred_check
      _
    $region31: #{tpu_custom_call.1} parent=1 // pred_check_branch
      %289 = sbr.rel (0) target = $region33
    $region32: #{tpu_custom_call.1} parent=1 // pred_region
      %s291 = ssub.s32 128, 128
      %292 = vsyncadd [#allocation3], %s291
      %s294 = sshll.u32 [#allocation2], 4
      %s295 = int_to_ptr.vmem [resolvable:$true] %s294
      %297 = dma.vmem_to_hbm [thread:$0]  %s295, 128, %s7, [#allocation3]
    $region33: #{tpu_custom_call.1} parent=1 // pred_fallthru
      _
    // Predicated region
    $region34: #{tpu_custom_call.1} parent=1 // pred_check
      _
    $region35: #{tpu_custom_call.1} parent=1 // pred_check_branch
      %299 = sbr.rel (0) target = $region37
    $region36: #{tpu_custom_call.1} parent=1 // pred_region
      %300 = dma.done [#allocation3], 128
    $region37: #{tpu_custom_call.1} parent=1 // pred_fallthru
      _
    %301 = vsyncpa [#allocation3], 1

</llo_original>
